<compile_context>
chip_gen: v7x
topology: tpu7x:2x2x1
jax: 0.10.0
libtpu: 0.0.40
codegen_flags: <defaults>
</compile_context>

<pallas_src>
import functools

import numpy as np
import jax
import jax.numpy as jnp
from jax.experimental import pallas as pl
from jax.experimental.pallas import tpu as pltpu


_VMEM_LIMIT_BYTES = 32 * 1024 * 1024       # >= default scoped VMEM on v5e/v6e, < v7x physical
_PIPELINE_BUDGET_BYTES = 20 * 1024 * 1024  # budget for double-buffered (2*in + 2*out) blocks


def eca_kernel_size(channels: int, b: int = 1, gamma: int = 2) -> int:
    k = int(abs((np.log2(channels) + b) / gamma))
    return k if k % 2 else k + 1


def _pick_hw_tile(hw: int, c: int, itemsize: int, max_tile=None) -> int:
    """Largest lane-dense tile (multiple of 128) dividing hw that fits the VMEM budget."""
    # Per-step footprint ~ 2x double-buffered (input + output) blocks of (c, tile).
    budget_lanes = _PIPELINE_BUDGET_BYTES // max(1, 4 * c * itemsize)
    cap = min(hw, max(128, budget_lanes))
    if max_tile is not None:
        cap = min(cap, max_tile)
    # Prefer the largest multiple of 128 that divides hw and fits the budget.
    cand = cap - (cap % 128)
    while cand >= 128:
        if hw % cand == 0:
            return cand
        cand -= 128
    return hw  # correctness fallback: full spatial extent as a single block


def _channel_conv_sigmoid(w_ref, pooled, pad_ref, C, k, pad):
    """k-tap zero-padded 'same' Conv1d over the channel (sublane) axis + sigmoid.

    pooled: (1, C, 1) f32 value. pad_ref: (1, C + 2*pad, 1) f32 VMEM scratch.
    Returns the (1, C, 1) f32 gate.
    """
    pad_ref[...] = jnp.zeros_like(pad_ref)
    pad_ref[:, pad:pad + C, :] = pooled
    y = w_ref[0] * pad_ref[:, 0:C, :]
    for j in range(1, k):
        y = y + w_ref[j] * pad_ref[:, j:j + C, :]
    return jax.nn.sigmoid(y)


def _eca_fused_kernel(w_ref, x_ref, o_ref, pad_ref, *, C, k, pad, inv_hw):
    # x_ref / o_ref: (1, C, HW) blocks (H*W on lanes); one grid step per batch element.
    pooled = jnp.sum(x_ref[...].astype(jnp.float32), axis=2, keepdims=True) * inv_hw
    gate = _channel_conv_sigmoid(w_ref, pooled, pad_ref, C, k, pad)        # (1, C, 1)
    # Re-read x from VMEM for the scale (streams; avoids keeping a second f32 copy live).
    o_ref[...] = (x_ref[...].astype(jnp.float32) * gate).astype(o_ref.dtype)


def _eca_pool_gate_kernel(w_ref, x_ref, gate_ref, acc_ref, pad_ref, *, C, k, pad, inv_hw):
    # grid = (B, n_hw); axis 1 accumulates the global-average pool.
    t = pl.program_id(1)

    @pl.when(t == 0)
    def _init():
        acc_ref[...] = jnp.zeros_like(acc_ref)

    acc_ref[...] += jnp.sum(x_ref[...].astype(jnp.float32), axis=2, keepdims=True)

    @pl.when(t == pl.num_programs(1) - 1)
    def _finalize():
        gate_ref[...] = _channel_conv_sigmoid(
            w_ref, acc_ref[...] * inv_hw, pad_ref, C, k, pad)


def _eca_scale_kernel(x_ref, gate_ref, o_ref):
    # gate (1, C, 1) broadcasts along the lane (H*W) axis for free.
    o_ref[...] = (x_ref[...].astype(jnp.float32) * gate_ref[...]).astype(o_ref.dtype)


def eca_forward(x, conv_weight, *, force_split=False, max_hw_tile=None):
    """x: (B, C, H, W); conv_weight: Conv1d(1, 1, k, bias=False) taps, any shape with k elems."""
    B, C, H, W = x.shape
    HW = H * W
    conv_weight = jnp.asarray(conv_weight, dtype=jnp.float32).reshape(-1)  # SMEM taps
    k = int(conv_weight.shape[0])
    pad = k // 2
    inv_hw = 1.0 / float(HW)
    itemsize = x.dtype.itemsize

    x3 = x.reshape(B, C, HW)                 # lane-dense layout: H*W on the lane axis

    fused_footprint = 4 * C * HW * itemsize  # 2x double-buffered (in + out) blocks
    use_fused = (not force_split) and fused_footprint <= _PIPELINE_BUDGET_BYTES

    if use_fused:
        # One pass over HBM (1R + 1W): pool + conv + sigmoid + scale per batch block.
        out3 = pl.pallas_call(
            functools.partial(_eca_fused_kernel, C=C, k=k, pad=pad, inv_hw=inv_hw),
            out_shape=jax.ShapeDtypeStruct((B, C, HW), x.dtype),
            grid_spec=pltpu.PrefetchScalarGridSpec(
                num_scalar_prefetch=1,
                grid=(B,),
                in_specs=[pl.BlockSpec((1, C, HW), lambda b, w: (b, 0, 0))],
                out_specs=pl.BlockSpec((1, C, HW), lambda b, w: (b, 0, 0)),
                scratch_shapes=[pltpu.VMEM((1, C + 2 * pad, 1), jnp.float32)],
            ),
            compiler_params=pltpu.CompilerParams(
                dimension_semantics=("parallel",),
                vmem_limit_bytes=_VMEM_LIMIT_BYTES,
            ),
        )(conv_weight, x3)
    else:
        # Split path for large feature maps (keeps blocks inside VMEM, incl. v7x 64 MiB):
        #   pass 1: pooled-sum accumulation over H*W tiles -> conv -> sigmoid -> (B, C, 1) gate
        #   pass 2: tiled elementwise scale with a fully parallel 2-D grid (megacore-friendly
        #           even at B == 1).
        hw_tile = _pick_hw_tile(HW, C, itemsize, max_hw_tile)
        n_hw = max(1, HW // hw_tile)

        gate = pl.pallas_call(
            functools.partial(_eca_pool_gate_kernel, C=C, k=k, pad=pad, inv_hw=inv_hw),
            out_shape=jax.ShapeDtypeStruct((B, C, 1), jnp.float32),
            grid_spec=pltpu.PrefetchScalarGridSpec(
                num_scalar_prefetch=1,
                grid=(B, n_hw),
                in_specs=[pl.BlockSpec((1, C, hw_tile), lambda b, t, w: (b, 0, t))],
                out_specs=pl.BlockSpec((1, C, 1), lambda b, t, w: (b, 0, 0)),
                scratch_shapes=[
                    pltpu.VMEM((1, C, 1), jnp.float32),            # pool accumulator
                    pltpu.VMEM((1, C + 2 * pad, 1), jnp.float32),  # zero-padded conv input
                ],
            ),
            compiler_params=pltpu.CompilerParams(
                dimension_semantics=("parallel", "arbitrary"),
                vmem_limit_bytes=_VMEM_LIMIT_BYTES,
            ),
        )(conv_weight, x3)

        out3 = pl.pallas_call(
            _eca_scale_kernel,
            out_shape=jax.ShapeDtypeStruct((B, C, HW), x.dtype),
            grid=(B, n_hw),
            in_specs=[
                pl.BlockSpec((1, C, hw_tile), lambda b, t: (b, 0, t)),
                pl.BlockSpec((1, C, 1), lambda b, t: (b, 0, 0)),
            ],
            out_specs=pl.BlockSpec((1, C, hw_tile), lambda b, t: (b, 0, t)),
            compiler_params=pltpu.CompilerParams(
                dimension_semantics=("parallel", "parallel"),
                vmem_limit_bytes=_VMEM_LIMIT_BYTES,
            ),
        )(x3, gate)

    return out3.reshape(B, C, H, W)


def eca_reference(x, conv_weight):
    """Pure-JAX reference matching the PyTorch module (computed in f32)."""
    B, C, H, W = x.shape
    w = jnp.asarray(conv_weight, dtype=jnp.float32).reshape(-1)
    k = w.shape[0]
    pad = k // 2
    pooled = jnp.mean(x.astype(jnp.float32), axis=(2, 3))   # (B, C)
    padded = jnp.pad(pooled, ((0, 0), (pad, pad)))
    y = jnp.zeros((B, C), dtype=jnp.float32)
    for j in range(k):
        y = y + w[j] * padded[:, j:j + C]
    gate = jax.nn.sigmoid(y)
    return x.astype(jnp.float32) * gate[:, :, None, None]


if __name__ == "__main__":
    key = jax.random.PRNGKey(0)
    kx1, kx2, kw1, kw2 = jax.random.split(key, 4)

    # --- Test 1: small shape -> fused single-pass kernel. ---
    B, C, H, W = 2, 8, 16, 16
    k = eca_kernel_size(C)                      # 3
    bound = 1.0 / np.sqrt(k)
    w1 = jax.random.uniform(kw1, (k,), minval=-bound, maxval=bound, dtype=jnp.float32)
    x1 = jax.random.normal(kx1, (B, C, H, W), dtype=jnp.float32)

    out1 = jax.block_until_ready(eca_forward(x1, w1))
    np.testing.assert_allclose(np.asarray(out1), np.asarray(eca_reference(x1, w1)),
                               rtol=1e-5, atol=1e-5)

    # --- Test 2: force the split (pool/gate + tiled scale) path with several HW tiles. ---
    B2, C2, H2, W2 = 1, 16, 32, 32
    k2 = eca_kernel_size(C2)                    # 3
    bound2 = 1.0 / np.sqrt(k2)
    w2 = jax.random.uniform(kw2, (k2,), minval=-bound2, maxval=bound2, dtype=jnp.float32)
    x2 = jax.random.normal(kx2, (B2, C2, H2, W2), dtype=jnp.float32)

    out2 = jax.block_until_ready(eca_forward(x2, w2, force_split=True, max_hw_tile=256))
    np.testing.assert_allclose(np.asarray(out2), np.asarray(eca_reference(x2, w2)),
                               rtol=1e-5, atol=1e-5)

    # --- Test 3: bf16 inputs/outputs, f32 pooling inside the kernel. ---
    x1_bf16 = x1.astype(jnp.bfloat16)
    out3 = jax.block_until_ready(eca_forward(x1_bf16, w1))
    ref3 = eca_reference(x1_bf16, w1)
    np.testing.assert_allclose(np.asarray(out3.astype(jnp.float32)), np.asarray(ref3),
                               rtol=2e-2, atol=2e-2)

    print("KERNEL_OK")
</pallas_src>

<mosaic_0001>
module attributes {stable_mosaic.version = 11 : i64} {
  func.func @_eca_fused_kernel(%arg0: i32, %arg1: memref<3xf32, #tpu.memory_space<smem>>, %arg2: memref<1x8x256xf32, #tpu.memory_space<vmem>>, %arg3: memref<1x8x256xf32, #tpu.memory_space<vmem>>, %arg4: memref<1x10x1xf32, #tpu.memory_space<vmem>>) attributes {dimension_semantics = [#tpu.dimension_semantics<parallel>], iteration_bounds = array<i64: 2>, scalar_prefetch = 1 : i64, scratch_operands = 1 : i64, tpu.core_type = #tpu.core_type<tc>, window_params = [{transform_indices = @transform_0, window_bounds = array<i64: 1, 8, 256>}, {transform_indices = @transform_1, window_bounds = array<i64: 1, 8, 256>}]} {
    %c0 = arith.constant 0 : index
    %c0_0 = arith.constant 0 : index
    %c0_1 = arith.constant 0 : index
    %0 = vector.load %arg2[%c0, %c0_0, %c0_1] : memref<1x8x256xf32, #tpu.memory_space<vmem>>, vector<1x8x256xf32>
    %cst = arith.constant dense<0.000000e+00> : vector<1x8xf32>
    %1 = vector.multi_reduction <add>, %0, %cst [2] : vector<1x8x256xf32> to vector<1x8xf32>
    %2 = vector.shape_cast %1 : vector<1x8xf32> to vector<1x8x1xf32>
    %cst_2 = arith.constant 3.906250e-03 : f32
    %3 = vector.broadcast %cst_2 : f32 to vector<1x8x1xf32>
    %4 = arith.mulf %2, %3 : vector<1x8x1xf32>
    %cst_3 = arith.constant 0.000000e+00 : f32
    %5 = vector.broadcast %cst_3 : f32 to vector<1x10x1xf32>
    %c0_4 = arith.constant 0 : index
    %c0_5 = arith.constant 0 : index
    %c0_6 = arith.constant 0 : index
    %6 = vector.load %arg4[%c0_4, %c0_5, %c0_6] : memref<1x10x1xf32, #tpu.memory_space<vmem>>, vector<1x10x1xf32>
    tpu.vector_store %arg4[%c0_4, %c0_5, %c0_6], %5 {strides = array<i32>} : memref<1x10x1xf32, #tpu.memory_space<vmem>>, vector<1x10x1xf32>,
    %c0_7 = arith.constant 0 : index
    %c1 = arith.constant 1 : index
    %c0_8 = arith.constant 0 : index
    %7 = vector.load %arg4[%c0_7, %c1, %c0_8] : memref<1x10x1xf32, #tpu.memory_space<vmem>>, vector<1x8x1xf32>
    tpu.vector_store %arg4[%c0_7, %c1, %c0_8], %4 {strides = array<i32>} : memref<1x10x1xf32, #tpu.memory_space<vmem>>, vector<1x8x1xf32>,
    %c0_9 = arith.constant 0 : index
    %8 = memref.load %arg1[%c0_9] : memref<3xf32, #tpu.memory_space<smem>>
    %c0_10 = arith.constant 0 : index
    %c0_11 = arith.constant 0 : index
    %c0_12 = arith.constant 0 : index
    %9 = vector.load %arg4[%c0_10, %c0_11, %c0_12] : memref<1x10x1xf32, #tpu.memory_space<vmem>>, vector<1x8x1xf32>
    %10 = vector.broadcast %8 : f32 to vector<1x8x1xf32>
    %11 = arith.mulf %10, %9 : vector<1x8x1xf32>
    %c1_13 = arith.constant 1 : index
    %12 = memref.load %arg1[%c1_13] : memref<3xf32, #tpu.memory_space<smem>>
    %c0_14 = arith.constant 0 : index
    %c1_15 = arith.constant 1 : index
    %c0_16 = arith.constant 0 : index
    %13 = vector.load %arg4[%c0_14, %c1_15, %c0_16] : memref<1x10x1xf32, #tpu.memory_space<vmem>>, vector<1x8x1xf32>
    %14 = vector.broadcast %12 : f32 to vector<1x8x1xf32>
    %15 = arith.mulf %14, %13 : vector<1x8x1xf32>
    %16 = arith.addf %11, %15 : vector<1x8x1xf32>
    %c2 = arith.constant 2 : index
    %17 = memref.load %arg1[%c2] : memref<3xf32, #tpu.memory_space<smem>>
    %c0_17 = arith.constant 0 : index
    %c2_18 = arith.constant 2 : index
    %c0_19 = arith.constant 0 : index
    %18 = vector.load %arg4[%c0_17, %c2_18, %c0_19] : memref<1x10x1xf32, #tpu.memory_space<vmem>>, vector<1x8x1xf32>
    %19 = vector.broadcast %17 : f32 to vector<1x8x1xf32>
    %20 = arith.mulf %19, %18 : vector<1x8x1xf32>
    %21 = arith.addf %16, %20 : vector<1x8x1xf32>
    %22 = arith.negf %21 : vector<1x8x1xf32>
    %23 = math.exp %22 : vector<1x8x1xf32>
    %cst_20 = arith.constant 1.000000e+00 : f32
    %24 = vector.broadcast %cst_20 : f32 to vector<1x8x1xf32>
    %25 = arith.addf %24, %23 : vector<1x8x1xf32>
    %26 = arith.divf %24, %25 : vector<1x8x1xf32>
    %c0_21 = arith.constant 0 : index
    %c0_22 = arith.constant 0 : index
    %c0_23 = arith.constant 0 : index
    %27 = vector.load %arg2[%c0_21, %c0_22, %c0_23] : memref<1x8x256xf32, #tpu.memory_space<vmem>>, vector<1x8x256xf32>
    %28 = vector.broadcast %26 : vector<1x8x1xf32> to vector<1x8x256xf32>
    %29 = arith.mulf %27, %28 : vector<1x8x256xf32>
    %c0_24 = arith.constant 0 : index
    %c0_25 = arith.constant 0 : index
    %c0_26 = arith.constant 0 : index
    %30 = vector.load %arg3[%c0_24, %c0_25, %c0_26] : memref<1x8x256xf32, #tpu.memory_space<vmem>>, vector<1x8x256xf32>
    tpu.vector_store %arg3[%c0_24, %c0_25, %c0_26], %29 {strides = array<i32>} : memref<1x8x256xf32, #tpu.memory_space<vmem>>, vector<1x8x256xf32>,
    return
  }
  func.func @transform_0(%arg0: i32, %arg1: memref<3xf32, #tpu.memory_space<smem>>) -> (i32, i32, i32) {
    %c0_i32 = arith.constant 0 : i32
    %c0_i32_0 = arith.constant 0 : i32
    %c0_i32_1 = arith.constant 0 : i32
    return %arg0, %c0_i32, %c0_i32_0 : i32, i32, i32
  }
  func.func @transform_1(%arg0: i32, %arg1: memref<3xf32, #tpu.memory_space<smem>>) -> (i32, i32, i32) {
    %c0_i32 = arith.constant 0 : i32
    %c0_i32_0 = arith.constant 0 : i32
    %c0_i32_1 = arith.constant 0 : i32
    return %arg0, %c0_i32, %c0_i32_0 : i32, i32, i32
  }
}

</mosaic_0001>

<llo_original>
// kernel: tpu_custom_call.1
$region0: #{tpu_custom_call.1}
  #allocation0 [shape = 'u32[]', space=smem, size = 0x4, offset = 0x4, fixed_abs, tag = 'smem constant byte address 0x4 - core index']
  #allocation1 [shape = 'u32[144,128]{1,0:T(1,128)}', space=vmem, size = 0x12000, scoped, tag = 'internal scratch']
  #allocation2 [shape = 'f32[1,10,1]{2,1,0:T(8,128)}', space=vmem, size = 0x2000, scoped, tag = 'scratch operand']
  #allocation3 [shape = 's32[1]{0}', space=sflag, size = 0x4, scoped, tag = 'scoped memory for tpu_custom_call.1']
  #allocation4 [shape = 'u8[512]{0}', space=smem, size = 0x200, scoped, tag = 'prefetched SMEM operand 0']
  %s0 = inlined_call_operand.hbm [shape: f32[3], index: 0, kind: input, shape index: {}]
  %s1 = inlined_call_operand.hbm [shape: f32[2,8,256], index: 1, kind: input, shape index: {}]
  %s2 = inlined_call_operand.hbm [shape: f32[2,8,256], index: 2, kind: output, shape index: {}]
  %s3 = sld [smem:[#allocation0]]
  $region41: #{tpu_custom_call.1} parent=0
    _
  %s5 = ssub.s32 1, %s3
  %s6 = scalar_select 0, %s5, %s3
  %8 = dma.hbm_to_smem %s0, 16, [#allocation4], [#allocation3]
  %9 = dma.done [#allocation3], 16
  %10 = sfence
  $region1: #{tpu_custom_call.1} parent=0
    #allocation5 [shape = 'u8[16384]{0}', space=vmem, size = 0x4000, scoped, tag = 'input window, operand 1']
    #allocation6 [shape = 's32[2]{0}', space=sflag, size = 0x8, scoped, tag = 'scoped memory for tpu_custom_call.1']
    #allocation7 [shape = 's32[2]{0}', space=sflag, size = 0x8, scoped, tag = 'scoped memory for tpu_custom_call.1']
    #allocation8 [shape = 'u8[16384]{0}', space=vmem, size = 0x4000, scoped, tag = 'output window, operand 0']
    %11 = vsyncpa [#allocation6], 0
    %s12 = scalar_lea.sflag [#allocation6], 1
    %13 = vsyncpa %s12, 0
    %14 = vsyncpa [#allocation7], 0
    %s15 = scalar_lea.sflag [#allocation7], 1
    %16 = vsyncpa %s15, 0
    loop: start=0, step=1, limit=4
    $region2: #{tpu_custom_call.1} parent=1 // loop_pre_header
      _
    $region3: #{tpu_custom_call.1} parent=1 // loop_header
      %s18 = sphi 0, %s22
      %p19 = scmp.ge.s32.totalorder %s18, 4
      %s28 = sphi 0, %s30
      %s31 = sphi 0, %s28
      %s32 = sphi 0, %s31
      %s48 = sphi 0, %s32
      %s54 = sphi 0, %s56
      %s57 = sphi 0, %s54
      %s58 = sphi 0, %s57
      %s74 = sphi 0, %s58
    $region4: #{tpu_custom_call.1} parent=1 // loop_header_branch
      %21 = sbr.rel (%p19) target = $region8
    $region5: #{tpu_custom_call.1} parent=1 // loop_body
      %s23 = ssub.s32 %s18, 1
      %s24 = ssub.s32 %s18, 2
      %s25 = sadd.s32 %s18, 1
      %s26 = ssub.s32 %s18, %s25
      %p27 = scmp.eq.s32.totalorder %s26, 0
      %s29 = sadd.s32 %s28, 1
      %s30 = scalar_select %p27, %s28, %s29
      %p33 = pneg %p27
      %p34 = scmp.eq.s32.totalorder %s18, 1
      %p35 = por %p33, %p34
      %p36 = scmp.ne.s32.totalorder %s28, %s31
      %p37 = scmp.eq.s32.totalorder %s18, 0
      %p38 = por %p36, %p37
      %p39 = scmp.ne.s32.totalorder %s28, %s31
      %p40 = scmp.eq.s32.totalorder %s23, 1
      %p41 = por %p39, %p40
      %p42 = scmp.ne.s32.totalorder %s31, %s32
      %p43 = scmp.eq.s32.totalorder %s23, 0
      %p44 = por %p42, %p43
      %p45 = scmp.ne.s32.totalorder %s31, %s32
      %p46 = scmp.eq.s32.totalorder %s24, 1
      %p47 = por %p45, %p46
      %p49 = scmp.ne.s32.totalorder %s32, %s48
      %p50 = scmp.eq.s32.totalorder %s24, 0
      %p51 = por %p49, %p50
      %s52 = ssub.s32 %s18, %s25
      %p53 = scmp.eq.s32.totalorder %s52, 0
      %s55 = sadd.s32 %s54, 1
      %s56 = scalar_select %p53, %s54, %s55
      %p59 = pneg %p53
      %p60 = scmp.eq.s32.totalorder %s18, 1
      %p61 = por %p59, %p60
      %p62 = scmp.ne.s32.totalorder %s54, %s57
      %p63 = scmp.eq.s32.totalorder %s18, 0
      %p64 = por %p62, %p63
      %p65 = scmp.ne.s32.totalorder %s54, %s57
      %p66 = scmp.eq.s32.totalorder %s23, 1
      %p67 = por %p65, %p66
      %p68 = scmp.ne.s32.totalorder %s57, %s58
      %p69 = scmp.eq.s32.totalorder %s23, 0
      %p70 = por %p68, %p69
      %p71 = scmp.ne.s32.totalorder %s57, %s58
      %p72 = scmp.eq.s32.totalorder %s24, 1
      %p73 = por %p71, %p72
      %p75 = scmp.ne.s32.totalorder %s58, %s74
      %p76 = scmp.eq.s32.totalorder %s24, 0
      %p77 = por %p75, %p76
      %p78 = scmp.le.s32.totalorder 1, %s18
      %p79 = scmp.lt.s32.totalorder %s18, 3
      %p80 = pnand %p78, %p79
      %p81 = pneg %p80
      // Predicated region
      $region9: #{tpu_custom_call.1} parent=5 // pred_check
        _
      $region10: #{tpu_custom_call.1} parent=5 // pred_check_branch
        %83 = sbr.rel (%p80) target = $region12
      $region11: #{tpu_custom_call.1} parent=5 // pred_region
        %s84 = ssub.s32 %s18, 1
      $region12: #{tpu_custom_call.1} parent=5 // pred_fallthru
        _
      %p85 = scmp.lt.s32.totalorder %s18, 2
      // Predicated region
      $region13: #{tpu_custom_call.1} parent=5 // pred_check
        %p86 = pneg %p85
      $region14: #{tpu_custom_call.1} parent=5 // pred_check_branch
        %88 = sbr.rel (%p86) target = $region16
      $region15: #{tpu_custom_call.1} parent=5 // pred_region
        // Predicated region
        $region17: #{tpu_custom_call.1} parent=15 // pred_check
          %p89 = pneg %p38
        $region18: #{tpu_custom_call.1} parent=15 // pred_check_branch
          %91 = sbr.rel (%p89) target = $region20
        $region19: #{tpu_custom_call.1} parent=15 // pred_region
          %s92 = sand.u32 %s28, 1
          %s93 = scalar_lea.sflag [#allocation6], %s92
          %s94 = sand.u32 %s28, 1
          %s95 = smul.addr %s94, 16
          %s96 = scalar_lea.vmem [#allocation5], %s95
          %s98 = ssub.s32 256, 256
          %99 = vsyncadd %s93, %s98
          %s100 = smul.addr %s18, 2
          %s101 = smul.addr %s100, 128
          %s102 = scalar_lea.hbm %s1, %s101
          %s104 = sshll.u32 %s96, 4
          %s105 = int_to_ptr.vmem [resolvable:$true] %s104
          %107 = dma.hbm_to_vmem [thread:$0]  %s102, 256, %s105, %s93
        $region20: #{tpu_custom_call.1} parent=15 // pred_fallthru
          _
      $region16: #{tpu_custom_call.1} parent=5 // pred_fallthru
        _
      %p108 = scmp.le.s32.totalorder 1, %s18
      %p109 = scmp.lt.s32.totalorder %s18, 3
      %p110 = pnand %p108, %p109
      %p111 = pneg %p110
      // Predicated region
      $region21: #{tpu_custom_call.1} parent=5 // pred_check
        _
      $region22: #{tpu_custom_call.1} parent=5 // pred_check_branch
        %113 = sbr.rel (%p110) target = $region24
      $region23: #{tpu_custom_call.1} parent=5 // pred_region
        %s114 = ssub.s32 %s18, 1
        %s115 = sand.u32 %s31, 1
        %s116 = scalar_lea.sflag [#allocation6], %s115
        %s117 = sand.u32 %s31, 1
        %s118 = smul.addr %s117, 16
        %s119 = scalar_lea.vmem [#allocation5], %s118
        // Predicated region
        $region25: #{tpu_custom_call.1} parent=23 // pred_check
          %p120 = pneg %p44
        $region26: #{tpu_custom_call.1} parent=23 // pred_check_branch
          %122 = sbr.rel (%p120) target = $region28
        $region27: #{tpu_custom_call.1} parent=23 // pred_region
          %123 = dma.done %s116, 256
        $region28: #{tpu_custom_call.1} parent=23 // pred_fallthru
          _
        %s124 = sand.u32 %s31, 1
        %s125 = scalar_lea.sflag [#allocation6], %s124
        %s126 = sand.u32 %s31, 1
        %s127 = smul.addr %s126, 16
        %s128 = scalar_lea.vmem [#allocation5], %s127
        %p129 = pneg %p44
        %p130 = pneg %p41
        %p131 = pneg %p70
        %p132 = pneg %p67
        %s133 = sand.u32 %s57, 1
        %s134 = scalar_lea.sflag [#allocation7], %s133
        %s135 = sand.u32 %s57, 1
        %s136 = smul.addr %s135, 16
        %s137 = scalar_lea.vmem [#allocation8], %s136
        %v138 = vld [vmem:[%s119] sm:$0xff]
        %v139 = vld [vmem:[%s119 + $0x8] sm:$0xff]
        %v140 = vadd.f32 %v138, %v139
        %141 = vadd.xlane.f32.xlu0 %v140
        %v142 = vpop.xlane.xlu0 %141
        %v143 = vmul.f32 %v142, 0.00390625
        %vm144 = vcmask 7168
        %145 = vst.msk [vmem:[#allocation2] sm:$0xff] %vm144, 0.0
        %vm146 = vcmask 1024
        %147 = vst.msk [vmem:[#allocation2 + $0x8] sm:$0x3] %vm146, 0.0
        %148 = vst.msk [vmem:[#allocation2 + $0x1] sm:$0xff] %vm144, %v143
        %s149 = sld [smem:[#allocation4]]
        %v150 = vld [vmem:[#allocation2] sm:$0xff]
        %v151 = vstv %s149
        %v152 = vmul.f32 %v151, %v150
        %s153 = sld [smem:[#allocation4 + $0x1]]
        %v154 = vld [vmem:[#allocation2 + $0x1] sm:$0xff]
        %v155 = vstv %s153
        %v156 = vmul.f32 %v155, %v154
        %v157 = vadd.f32 %v152, %v156
        %s158 = sld [smem:[#allocation4 + $0x2]]
        %v159 = vld [vmem:[#allocation2 + $0x2] sm:$0xff]
        %v160 = vstv %s158
        %v161 = vmul.f32 %v160, %v159
        %v162 = vadd.f32 %v157, %v161
        %v163 = vxor.u32 %v162, 2147483648
        %v164 = vmul.f32 %v163, 1.442695
        %v165 = vpow.pop %v164
        %v166 = vadd.f32 %v165, 1.0
        %v167 = vrcp.pop %v166
        %v168 = vmul.f32 1.0, %v167
        %v169 = vld [vmem:[%s119] sm:$0xff]
        %v170 = vld [vmem:[%s119 + $0x8] sm:$0xff]
        %172 = vset.pattern.permute.xlu0 0
        %173 = vperm.xlu0 %172, %v168
        %v174 = vpop.permute.xlu0 %173
        %v176 = vmul.f32 %v169, %v174
        %v177 = vmul.f32 %v170, %v174
        %178 = vst [vmem:[%s137] sm:$0xff] %v176
        %179 = vst [vmem:[%s137 + $0x8] sm:$0xff] %v177
        %s180 = sand.u32 %s57, 1
        %s181 = scalar_lea.sflag [#allocation7], %s180
        %s182 = sand.u32 %s57, 1
        %s183 = smul.addr %s182, 16
        %s184 = scalar_lea.vmem [#allocation8], %s183
        // Predicated region
        $region29: #{tpu_custom_call.1} parent=23 // pred_check
          %p185 = pneg %p67
        $region30: #{tpu_custom_call.1} parent=23 // pred_check_branch
          %187 = sbr.rel (%p185) target = $region32
        $region31: #{tpu_custom_call.1} parent=23 // pred_region
          %s189 = ssub.s32 256, 256
          %190 = vsyncadd %s181, %s189
          %s191 = smul.addr %s23, 2
          %s192 = smul.addr %s191, 128
          %s193 = scalar_lea.hbm %s2, %s192
          %s195 = sshll.u32 %s184, 4
          %s196 = int_to_ptr.vmem [resolvable:$true] %s195
          %198 = dma.vmem_to_hbm [thread:$0]  %s196, 256, %s193, %s181
        $region32: #{tpu_custom_call.1} parent=23 // pred_fallthru
          _
      $region24: #{tpu_custom_call.1} parent=5 // pred_fallthru
        _
      %p199 = scmp.le.s32.totalorder 2, %s18
      // Predicated region
      $region33: #{tpu_custom_call.1} parent=5 // pred_check
        %p200 = pneg %p199
      $region34: #{tpu_custom_call.1} parent=5 // pred_check_branch
        %202 = sbr.rel (%p200) target = $region36
      $region35: #{tpu_custom_call.1} parent=5 // pred_region
        %s203 = ssub.s32 %s18, 2
        // Predicated region
        $region37: #{tpu_custom_call.1} parent=35 // pred_check
          %p204 = pneg %p73
        $region38: #{tpu_custom_call.1} parent=35 // pred_check_branch
          %206 = sbr.rel (%p204) target = $region40
        $region39: #{tpu_custom_call.1} parent=35 // pred_region
          %s207 = sand.u32 %s58, 1
          %s208 = scalar_lea.sflag [#allocation7], %s207
          %s209 = sand.u32 %s58, 1
          %s210 = smul.addr %s209, 16
          %s211 = scalar_lea.vmem [#allocation8], %s210
          %212 = dma.done %s208, 256
        $region40: #{tpu_custom_call.1} parent=35 // pred_fallthru
          _
      $region36: #{tpu_custom_call.1} parent=5 // pred_fallthru
        _
    $region6: #{tpu_custom_call.1} parent=1 // loop_footer
      %s22 = sadd.s32 1, %s18
    $region7: #{tpu_custom_call.1} parent=1 // loop_footer_branch
      %17 = sbr.rel target = $region3
    $region8: #{tpu_custom_call.1} parent=1 // loop_exit
      _
    %213 = vsyncpa [#allocation6], 1
    %s214 = scalar_lea.sflag [#allocation6], 1
    %215 = vsyncpa %s214, 1
    %216 = vsyncpa [#allocation7], 1
    %s217 = scalar_lea.sflag [#allocation7], 1
    %218 = vsyncpa %s217, 1

</llo_original>
